<compile_context>
chip_gen: v5e
topology: v5e:2x2
jax: 0.10.0
libtpu: 0.0.40
codegen_flags: <defaults>
</compile_context>

<pallas_src>
import jax
import jax.numpy as jnp
from jax import lax
from jax.experimental import pallas as pl
from jax.experimental.pallas import tpu as pltpu

# ---------------- configuration (mirrors SplAtConv1d.__init__) ----------------
B = 2              # batch
IN_CH = 8          # in_channels
CHANNELS = 8       # channels
L = 16             # input length
K = 3              # kernel_size
STRIDE = 1
PAD = 1
DIL = 1
GROUPS = 2         # cardinality
RADIX = 2
RED = 4            # reduction_factor
EPS = 1e-5         # BatchNorm eps

INTER = max(IN_CH * RADIX // RED, 32)     # inter_channels = 32
CRAD = CHANNELS * RADIX                   # conv output channels = 16
GCONV = GROUPS * RADIX                    # conv groups = 4
CIN_G = IN_CH // GCONV                    # input channels per conv group = 2
COUT_G = CRAD // GCONV                    # output channels per conv group = 4
CH_PER = CHANNELS // GROUPS               # channels per cardinal group = 4
INTER_PER = INTER // GROUPS               # fc1 outputs per cardinal group = 16
OUT2_PER = CRAD // GROUPS                 # fc2 outputs per cardinal group = 8
L_OUT = (L + 2 * PAD - DIL * (K - 1) - 1) // STRIDE + 1
BL = B * L_OUT                            # batch folded onto the lane axis
P_ROWS = max(CRAD, INTER)                 # rows of the packed parameter slab

assert CH_PER == COUT_G
# TODO(synk): the lane-folded layout relies on STRIDE == 1 (L_OUT == L); a strided conv
# needs a per-batch-segment im2col instead of the pltpu.roll shifts used below.
assert STRIDE == 1 and L_OUT == L


# --------------------------------- kernel -------------------------------------
def _splat_kernel(x_ref, wc_ref, w1_ref, w2_ref, p_ref, o_ref):
    xt = x_ref[...]                          # (IN_CH, BL), lane = b*L_OUT + o
    p = p_ref[...]                           # (P_ROWS, 5) packed per-channel params
    s0 = p[:CRAD, 0:1]                       # fused conv-bias + BN0 scale / shift
    t0 = p[:CRAD, 1:2]
    s1 = p[:INTER, 2:3]                      # fused fc1-bias + BN1 scale / shift
    t1 = p[:INTER, 3:4]
    b2 = p[:CRAD, 4:5]                       # fc2 bias (rSoftMax-permuted)

    # ---- grouped Conv1d as ONE block-diagonal contraction ---------------------
    # build the K taps in-register (lane roll + boundary mask -> zero padding)
    l_idx = lax.broadcasted_iota(jnp.int32, (IN_CH, BL), 1)
    o_idx = l_idx
    for b in range(1, B):                    # position within each length segment
        o_idx = o_idx - jnp.where(l_idx >= b * L_OUT, L_OUT, 0)
    taps = []
    for k in range(K):
        s = k * DIL - PAD
        if s == 0:
            taps.append(xt)
        else:
            shifted = pltpu.roll(xt, (-s) % BL, axis=1)
            valid = jnp.logical_and(o_idx + s >= 0, o_idx + s < L)
            taps.append(jnp.where(valid, shifted, 0.0))
    xcol = jnp.concatenate(taps, axis=0)     # (K*IN_CH, BL), rows k-major

    y = jnp.dot(wc_ref[...], xcol, preferred_element_type=jnp.float32)  # (CRAD, BL)
    y = jnp.maximum(y * s0 + t0, 0.0)        # fused conv-bias + BN0 + ReLU

    # ---- split-attention branch, batched over B on the lane axis --------------
    splits = [y[r * CHANNELS:(r + 1) * CHANNELS, :] for r in range(RADIX)]
    gap = splits[0]
    for r in range(1, RADIX):
        gap = gap + splits[r]                # (CHANNELS, BL)

    # per-batch global average pool over L_OUT, re-broadcast across each segment,
    # as one matmul with a block-diagonal averaging matrix built from iotas.
    ri = lax.broadcasted_iota(jnp.int32, (BL, BL), 0)
    ci = lax.broadcasted_iota(jnp.int32, (BL, BL), 1)
    seg_r = jnp.zeros_like(ri)
    seg_c = jnp.zeros_like(ci)
    for b in range(1, B):
        seg_r = seg_r + jnp.where(ri >= b * L_OUT, 1, 0)
        seg_c = seg_c + jnp.where(ci >= b * L_OUT, 1, 0)
    pool = jnp.where(seg_r == seg_c, 1.0 / L_OUT, 0.0)                  # (BL, BL)
    gap = jnp.dot(gap, pool, preferred_element_type=jnp.float32)        # (CHANNELS, BL)

    # fc1 (block-diagonal) + fused bias/BN1 + ReLU
    h = jnp.dot(w1_ref[...], gap, preferred_element_type=jnp.float32)   # (INTER, BL)
    h = jnp.maximum(h * s1 + t1, 0.0)

    # fc2 (block-diagonal, rows permuted to attention/conv channel order) + bias
    a = jnp.dot(w2_ref[...], h, preferred_element_type=jnp.float32) + b2  # (CRAD, BL)

    # rSoftMax over the radix axis (rows c and c+CHANNELS), or sigmoid if radix==1
    if RADIX > 1:
        a_r = [a[r * CHANNELS:(r + 1) * CHANNELS, :] for r in range(RADIX)]
        m = a_r[0]
        for r in range(1, RADIX):
            m = jnp.maximum(m, a_r[r])
        e_r = [jnp.exp(ar - m) for ar in a_r]
        den = e_r[0]
        for r in range(1, RADIX):
            den = den + e_r[r]
        inv = pl.reciprocal(den, approx=True)        # EUP slot, essentially free
        att = [er * inv for er in e_r]
    else:
        att = [pl.reciprocal(1.0 + jnp.exp(-a), approx=True)]

    # weighted sum of radix splits -> single lane-dense output store
    out = att[0] * splits[0]
    for r in range(1, RADIX):
        out = out + att[r] * splits[r]
    o_ref[...] = out                                  # (CHANNELS, BL)


# -------------------------------- wrapper --------------------------------------
def splat_conv1d(x, params):
    (w_conv, b_conv, g0, be0, m0, v0,
     w1, b1, g1, be1, m1, v1, w2, b2) = params
    f32 = jnp.float32

    # fold conv/fc1 bias + BatchNorm (eval mode) into per-channel (scale, shift)
    s0 = g0 / jnp.sqrt(v0 + EPS)
    t0 = be0 + (b_conv - m0) * s0
    s1 = g1 / jnp.sqrt(v1 + EPS)
    t1 = be1 + (b1 - m1) * s1

    # block-diagonal grouped-conv weight, (CRAD, K*IN_CH), columns k-major
    wc_bd = jnp.zeros((CRAD, K, IN_CH), f32)
    for gc in range(GCONV):
        rows = slice(gc * COUT_G, (gc + 1) * COUT_G)
        cols = slice(gc * CIN_G, (gc + 1) * CIN_G)
        wc_bd = wc_bd.at[rows, :, cols].set(jnp.transpose(w_conv[rows], (0, 2, 1)))
    wc_bd = wc_bd.reshape(CRAD, K * IN_CH).astype(f32)

    # block-diagonal fc1 weight (INTER, CHANNELS)
    w1_bd = jnp.zeros((INTER, CHANNELS), f32)
    for g in range(GROUPS):
        w1_bd = w1_bd.at[g * INTER_PER:(g + 1) * INTER_PER,
                         g * CH_PER:(g + 1) * CH_PER].set(
            w1[g * INTER_PER:(g + 1) * INTER_PER, :, 0])

    # block-diagonal fc2 weight with rows permuted so that row index equals the
    # conv/attention channel index (r*CHANNELS + g*CH_PER + ch), matching rSoftMax.
    w2_bd = jnp.zeros((CRAD, INTER), f32)
    b2p = jnp.zeros((CRAD,), f32)
    for g in range(GROUPS):
        for r in range(RADIX):
            src = slice(g * OUT2_PER + r * CH_PER, g * OUT2_PER + (r + 1) * CH_PER)
            dst = slice(r * CHANNELS + g * CH_PER, r * CHANNELS + (g + 1) * CH_PER)
            w2_bd = w2_bd.at[dst, g * INTER_PER:(g + 1) * INTER_PER].set(w2[src, :, 0])
            b2p = b2p.at[dst].set(b2[src])

    # pack all small per-channel params into ONE slab: 1 DMA / 1 VMEM tile
    pslab = jnp.zeros((P_ROWS, 5), f32)
    pslab = pslab.at[:CRAD, 0].set(s0.astype(f32))
    pslab = pslab.at[:CRAD, 1].set(t0.astype(f32))
    pslab = pslab.at[:INTER, 2].set(s1.astype(f32))
    pslab = pslab.at[:INTER, 3].set(t1.astype(f32))
    pslab = pslab.at[:CRAD, 4].set(b2p)

    # channels on sublanes, (batch, length) folded on lanes (no pad pass needed)
    xt = jnp.transpose(x, (1, 0, 2)).reshape(IN_CH, B * L).astype(f32)

    out = pl.pallas_call(
        _splat_kernel,
        out_shape=jax.ShapeDtypeStruct((CHANNELS, BL), f32),
    )(xt, wc_bd, w1_bd.astype(f32), w2_bd.astype(f32), pslab)

    # restore NCW layout
    return jnp.transpose(out.reshape(CHANNELS, B, L_OUT), (1, 0, 2))


# ------------------------ pure-JAX reference (for checking) ---------------------
def reference(x, params):
    (w_conv, b_conv, g0, be0, m0, v0,
     w1, b1, g1, be1, m1, v1, w2, b2) = params
    dn = ('NCH', 'OIH', 'NCH')
    hp = lax.Precision.HIGHEST

    y = lax.conv_general_dilated(x, w_conv, (STRIDE,), [(PAD, PAD)],
                                 rhs_dilation=(DIL,), dimension_numbers=dn,
                                 feature_group_count=GCONV, precision=hp)
    y = y + b_conv[None, :, None]
    y = (y - m0[None, :, None]) / jnp.sqrt(v0[None, :, None] + EPS) * g0[None, :, None] + be0[None, :, None]
    y = jnp.maximum(y, 0.0)

    if RADIX > 1:
        splits = [y[:, r * CHANNELS:(r + 1) * CHANNELS] for r in range(RADIX)]
        gap = sum(splits)
    else:
        gap = y
    gap = jnp.mean(gap, axis=-1, keepdims=True)

    h = lax.conv_general_dilated(gap, w1, (1,), [(0, 0)], dimension_numbers=dn,
                                 feature_group_count=GROUPS, precision=hp)
    h = h + b1[None, :, None]
    h = (h - m1[None, :, None]) / jnp.sqrt(v1[None, :, None] + EPS) * g1[None, :, None] + be1[None, :, None]
    h = jnp.maximum(h, 0.0)

    a = lax.conv_general_dilated(h, w2, (1,), [(0, 0)], dimension_numbers=dn,
                                 feature_group_count=GROUPS, precision=hp)
    a = a + b2[None, :, None]

    if RADIX > 1:
        a = a.reshape(B, GROUPS, RADIX, -1)
        a = jnp.swapaxes(a, 1, 2)
        a = jax.nn.softmax(a, axis=1)
        a = a.reshape(B, -1)
    else:
        a = jax.nn.sigmoid(a.reshape(B, -1))
    a = a.reshape(B, -1, 1)

    if RADIX > 1:
        attens = [a[:, r * CHANNELS:(r + 1) * CHANNELS] for r in range(RADIX)]
        out = sum(at * sp for at, sp in zip(attens, splits))
    else:
        out = a * y
    return out


# ---------------------------------- main ----------------------------------------
if __name__ == "__main__":
    key = jax.random.PRNGKey(0)
    ks = jax.random.split(key, 16)
    f32 = jnp.float32

    # deterministic synthetic parameters (shapes dictated by SplAtConv1d.__init__)
    w_conv = 0.1 * jax.random.normal(ks[0], (CRAD, CIN_G, K), f32)
    b_conv = 0.1 * jax.random.normal(ks[1], (CRAD,), f32)
    g0 = 1.0 + 0.1 * jax.random.normal(ks[2], (CRAD,), f32)
    be0 = 0.1 * jax.random.normal(ks[3], (CRAD,), f32)
    m0 = 0.1 * jax.random.normal(ks[4], (CRAD,), f32)
    v0 = jax.random.uniform(ks[5], (CRAD,), f32, 0.5, 1.5)
    w1 = 0.1 * jax.random.normal(ks[6], (INTER, CH_PER, 1), f32)
    b1 = 0.1 * jax.random.normal(ks[7], (INTER,), f32)
    g1 = 1.0 + 0.1 * jax.random.normal(ks[8], (INTER,), f32)
    be1 = 0.1 * jax.random.normal(ks[9], (INTER,), f32)
    m1 = 0.1 * jax.random.normal(ks[10], (INTER,), f32)
    v1 = jax.random.uniform(ks[11], (INTER,), f32, 0.5, 1.5)
    w2 = 0.1 * jax.random.normal(ks[12], (CRAD, INTER_PER, 1), f32)
    b2 = 0.1 * jax.random.normal(ks[13], (CRAD,), f32)
    params = (w_conv, b_conv, g0, be0, m0, v0, w1, b1, g1, be1, m1, v1, w2, b2)

    x = jax.random.normal(ks[15], (B, IN_CH, L), f32)

    out = splat_conv1d(x, params)
    out = jax.block_until_ready(out)

    ref = jax.block_until_ready(reference(x, params))
    assert out.shape == (B, CHANNELS, L_OUT)
    assert jnp.allclose(out, ref, atol=1e-3, rtol=1e-3), float(jnp.max(jnp.abs(out - ref)))

    print("KERNEL_OK")
</pallas_src>

<mosaic_0001>
module attributes {stable_mosaic.version = 11 : i64} {
  func.func @_splat_kernel(%arg0: memref<8x32xf32, #tpu.memory_space<vmem>>, %arg1: memref<16x24xf32, #tpu.memory_space<vmem>>, %arg2: memref<32x8xf32, #tpu.memory_space<vmem>>, %arg3: memref<16x32xf32, #tpu.memory_space<vmem>>, %arg4: memref<32x5xf32, #tpu.memory_space<vmem>>, %arg5: memref<8x32xf32, #tpu.memory_space<vmem>>) attributes {dimension_semantics = [], scalar_prefetch = 0 : i64, scratch_operands = 0 : i64, tpu.core_type = #tpu.core_type<tc>} {
    %c0 = arith.constant 0 : index
    %c0_0 = arith.constant 0 : index
    %0 = vector.load %arg0[%c0, %c0_0] : memref<8x32xf32, #tpu.memory_space<vmem>>, vector<8x32xf32>
    %c0_1 = arith.constant 0 : index
    %c0_2 = arith.constant 0 : index
    %1 = vector.load %arg4[%c0_1, %c0_2] : memref<32x5xf32, #tpu.memory_space<vmem>>, vector<32x5xf32>
    %2 = vector.extract_strided_slice %1 {offsets = [0, 0], sizes = [16, 1], strides = [1, 1]} : vector<32x5xf32> to vector<16x1xf32>
    %3 = vector.extract_strided_slice %1 {offsets = [0, 1], sizes = [16, 1], strides = [1, 1]} : vector<32x5xf32> to vector<16x1xf32>
    %4 = vector.extract_strided_slice %1 {offsets = [0, 2], sizes = [32, 1], strides = [1, 1]} : vector<32x5xf32> to vector<32x1xf32>
    %5 = vector.extract_strided_slice %1 {offsets = [0, 3], sizes = [32, 1], strides = [1, 1]} : vector<32x5xf32> to vector<32x1xf32>
    %6 = vector.extract_strided_slice %1 {offsets = [0, 4], sizes = [16, 1], strides = [1, 1]} : vector<32x5xf32> to vector<16x1xf32>
    %7 = tpu.iota {dimensions = array<i32: 1>} : vector<8x32xi32>
    %c16_i32 = arith.constant 16 : i32
    %8 = vector.broadcast %c16_i32 : i32 to vector<8x32xi32>
    %9 = arith.cmpi sge, %7, %8 : vector<8x32xi32>
    %c16_i32_3 = arith.constant 16 : i32
    %c0_i32 = arith.constant 0 : i32
    %10 = vector.broadcast %c16_i32_3 : i32 to vector<8x32xi32>
    %11 = vector.broadcast %c0_i32 : i32 to vector<8x32xi32>
    %12 = arith.select %9, %10, %11 : vector<8x32xi1>, vector<8x32xi32>
    %13 = arith.subi %7, %12 : vector<8x32xi32>
    %c1_i32 = arith.constant 1 : i32
    %14 = tpu.dynamic_rotate %0 by %c1_i32 dim 1 : vector<8x32xf32>, i32 -> vector<8x32xf32>
    %c-1_i32 = arith.constant -1 : i32
    %15 = vector.broadcast %c-1_i32 : i32 to vector<8x32xi32>
    %16 = arith.addi %13, %15 : vector<8x32xi32>
    %c0_i32_4 = arith.constant 0 : i32
    %17 = vector.broadcast %c0_i32_4 : i32 to vector<8x32xi32>
    %18 = arith.cmpi sge, %16, %17 : vector<8x32xi32>
    %c-1_i32_5 = arith.constant -1 : i32
    %19 = vector.broadcast %c-1_i32_5 : i32 to vector<8x32xi32>
    %20 = arith.addi %13, %19 : vector<8x32xi32>
    %c16_i32_6 = arith.constant 16 : i32
    %21 = vector.broadcast %c16_i32_6 : i32 to vector<8x32xi32>
    %22 = arith.cmpi slt, %20, %21 : vector<8x32xi32>
    %23 = arith.andi %18, %22 : vector<8x32xi1>
    %cst = arith.constant 0.000000e+00 : f32
    %24 = vector.broadcast %cst : f32 to vector<8x32xf32>
    %25 = arith.select %23, %14, %24 : vector<8x32xi1>, vector<8x32xf32>
    %c31_i32 = arith.constant 31 : i32
    %26 = tpu.dynamic_rotate %0 by %c31_i32 dim 1 : vector<8x32xf32>, i32 -> vector<8x32xf32>
    %c1_i32_7 = arith.constant 1 : i32
    %27 = vector.broadcast %c1_i32_7 : i32 to vector<8x32xi32>
    %28 = arith.addi %13, %27 : vector<8x32xi32>
    %c0_i32_8 = arith.constant 0 : i32
    %29 = vector.broadcast %c0_i32_8 : i32 to vector<8x32xi32>
    %30 = arith.cmpi sge, %28, %29 : vector<8x32xi32>
    %c1_i32_9 = arith.constant 1 : i32
    %31 = vector.broadcast %c1_i32_9 : i32 to vector<8x32xi32>
    %32 = arith.addi %13, %31 : vector<8x32xi32>
    %c16_i32_10 = arith.constant 16 : i32
    %33 = vector.broadcast %c16_i32_10 : i32 to vector<8x32xi32>
    %34 = arith.cmpi slt, %32, %33 : vector<8x32xi32>
    %35 = arith.andi %30, %34 : vector<8x32xi1>
    %cst_11 = arith.constant 0.000000e+00 : f32
    %36 = vector.broadcast %cst_11 : f32 to vector<8x32xf32>
    %37 = arith.select %35, %26, %36 : vector<8x32xi1>, vector<8x32xf32>
    %38 = tpu.concatenate %25, %0, %37 in 0 : vector<8x32xf32>, vector<8x32xf32>, vector<8x32xf32> -> vector<24x32xf32>
    %c0_12 = arith.constant 0 : index
    %c0_13 = arith.constant 0 : index
    %39 = vector.load %arg1[%c0_12, %c0_13] : memref<16x24xf32, #tpu.memory_space<vmem>>, vector<16x24xf32>
    %cst_14 = arith.constant dense<0.000000e+00> : vector<16x32xf32>
    %40 = tpu.matmul %39, %38, %cst_14 {dimension_numbers = #tpu.dot_dimension_numbers<[1], [0], [0], [1], [0, 0, 1, 1], [], []>} : vector<16x24xf32>, vector<24x32xf32>, vector<16x32xf32> -> vector<16x32xf32>
    %41 = vector.broadcast %2 : vector<16x1xf32> to vector<16x32xf32>
    %42 = arith.mulf %40, %41 : vector<16x32xf32>
    %43 = vector.broadcast %3 : vector<16x1xf32> to vector<16x32xf32>
    %44 = arith.addf %42, %43 : vector<16x32xf32>
    %cst_15 = arith.constant 0.000000e+00 : f32
    %45 = vector.broadcast %cst_15 : f32 to vector<16x32xf32>
    %46 = arith.maximumf %44, %45 : vector<16x32xf32>
    %47 = vector.extract_strided_slice %46 {offsets = [0, 0], sizes = [8, 32], strides = [1, 1]} : vector<16x32xf32> to vector<8x32xf32>
    %48 = vector.extract_strided_slice %46 {offsets = [8, 0], sizes = [8, 32], strides = [1, 1]} : vector<16x32xf32> to vector<8x32xf32>
    %49 = arith.addf %47, %48 : vector<8x32xf32>
    %50 = tpu.iota {dimensions = array<i32: 0>} : vector<32x32xi32>
    %51 = tpu.iota {dimensions = array<i32: 1>} : vector<32x32xi32>
    %c0_i32_16 = arith.constant 0 : i32
    %52 = vector.broadcast %c0_i32_16 : i32 to vector<32x32xi32>
    %c0_i32_17 = arith.constant 0 : i32
    %53 = vector.broadcast %c0_i32_17 : i32 to vector<32x32xi32>
    %c16_i32_18 = arith.constant 16 : i32
    %54 = vector.broadcast %c16_i32_18 : i32 to vector<32x32xi32>
    %55 = arith.cmpi sge, %50, %54 : vector<32x32xi32>
    %c1_i32_19 = arith.constant 1 : i32
    %c0_i32_20 = arith.constant 0 : i32
    %56 = vector.broadcast %c1_i32_19 : i32 to vector<32x32xi32>
    %57 = vector.broadcast %c0_i32_20 : i32 to vector<32x32xi32>
    %58 = arith.select %55, %56, %57 : vector<32x32xi1>, vector<32x32xi32>
    %59 = arith.addi %52, %58 : vector<32x32xi32>
    %c16_i32_21 = arith.constant 16 : i32
    %60 = vector.broadcast %c16_i32_21 : i32 to vector<32x32xi32>
    %61 = arith.cmpi sge, %51, %60 : vector<32x32xi32>
    %c1_i32_22 = arith.constant 1 : i32
    %c0_i32_23 = arith.constant 0 : i32
    %62 = vector.broadcast %c1_i32_22 : i32 to vector<32x32xi32>
    %63 = vector.broadcast %c0_i32_23 : i32 to vector<32x32xi32>
    %64 = arith.select %61, %62, %63 : vector<32x32xi1>, vector<32x32xi32>
    %65 = arith.addi %53, %64 : vector<32x32xi32>
    %66 = arith.cmpi eq, %59, %65 : vector<32x32xi32>
    %cst_24 = arith.constant 6.250000e-02 : f32
    %cst_25 = arith.constant 0.000000e+00 : f32
    %67 = vector.broadcast %cst_24 : f32 to vector<32x32xf32>
    %68 = vector.broadcast %cst_25 : f32 to vector<32x32xf32>
    %69 = arith.select %66, %67, %68 : vector<32x32xi1>, vector<32x32xf32>
    %cst_26 = arith.constant dense<0.000000e+00> : vector<8x32xf32>
    %70 = tpu.matmul %49, %69, %cst_26 {dimension_numbers = #tpu.dot_dimension_numbers<[1], [0], [0], [1], [0, 0, 1, 1], [], []>} : vector<8x32xf32>, vector<32x32xf32>, vector<8x32xf32> -> vector<8x32xf32>
    %c0_27 = arith.constant 0 : index
    %c0_28 = arith.constant 0 : index
    %71 = vector.load %arg2[%c0_27, %c0_28] : memref<32x8xf32, #tpu.memory_space<vmem>>, vector<32x8xf32>
    %cst_29 = arith.constant dense<0.000000e+00> : vector<32x32xf32>
    %72 = tpu.matmul %71, %70, %cst_29 {dimension_numbers = #tpu.dot_dimension_numbers<[1], [0], [0], [1], [0, 0, 1, 1], [], []>} : vector<32x8xf32>, vector<8x32xf32>, vector<32x32xf32> -> vector<32x32xf32>
    %73 = vector.broadcast %4 : vector<32x1xf32> to vector<32x32xf32>
    %74 = arith.mulf %72, %73 : vector<32x32xf32>
    %75 = vector.broadcast %5 : vector<32x1xf32> to vector<32x32xf32>
    %76 = arith.addf %74, %75 : vector<32x32xf32>
    %cst_30 = arith.constant 0.000000e+00 : f32
    %77 = vector.broadcast %cst_30 : f32 to vector<32x32xf32>
    %78 = arith.maximumf %76, %77 : vector<32x32xf32>
    %c0_31 = arith.constant 0 : index
    %c0_32 = arith.constant 0 : index
    %79 = vector.load %arg3[%c0_31, %c0_32] : memref<16x32xf32, #tpu.memory_space<vmem>>, vector<16x32xf32>
    %cst_33 = arith.constant dense<0.000000e+00> : vector<16x32xf32>
    %80 = tpu.matmul %79, %78, %cst_33 {dimension_numbers = #tpu.dot_dimension_numbers<[1], [0], [0], [1], [0, 0, 1, 1], [], []>} : vector<16x32xf32>, vector<32x32xf32>, vector<16x32xf32> -> vector<16x32xf32>
    %81 = vector.broadcast %6 : vector<16x1xf32> to vector<16x32xf32>
    %82 = arith.addf %80, %81 : vector<16x32xf32>
    %83 = vector.extract_strided_slice %82 {offsets = [0, 0], sizes = [8, 32], strides = [1, 1]} : vector<16x32xf32> to vector<8x32xf32>
    %84 = vector.extract_strided_slice %82 {offsets = [8, 0], sizes = [8, 32], strides = [1, 1]} : vector<16x32xf32> to vector<8x32xf32>
    %85 = arith.maximumf %83, %84 : vector<8x32xf32>
    %86 = arith.subf %83, %85 : vector<8x32xf32>
    %87 = math.exp %86 : vector<8x32xf32>
    %88 = arith.subf %84, %85 : vector<8x32xf32>
    %89 = math.exp %88 : vector<8x32xf32>
    %90 = arith.addf %87, %89 : vector<8x32xf32>
    %91 = tpu.reciprocal %90 {approx = true} : vector<8x32xf32> -> vector<8x32xf32>
    %92 = arith.mulf %87, %91 : vector<8x32xf32>
    %93 = arith.mulf %89, %91 : vector<8x32xf32>
    %94 = arith.mulf %92, %47 : vector<8x32xf32>
    %95 = arith.mulf %93, %48 : vector<8x32xf32>
    %96 = arith.addf %94, %95 : vector<8x32xf32>
    %c0_34 = arith.constant 0 : index
    %c0_35 = arith.constant 0 : index
    %97 = vector.load %arg5[%c0_34, %c0_35] : memref<8x32xf32, #tpu.memory_space<vmem>>, vector<8x32xf32>
    tpu.vector_store %arg5[%c0_34, %c0_35], %96 {strides = array<i32>} : memref<8x32xf32, #tpu.memory_space<vmem>>, vector<8x32xf32>,
    return
  }
}

</mosaic_0001>

<llo_original>
// kernel: tpu_custom_call.1
$region0: #{tpu_custom_call.1}
  #allocation0 [shape = 'u32[]', space=smem, size = 0x4, offset = 0x4, fixed_abs, tag = 'smem constant byte address 0x4 - core index']
  #allocation1 [shape = 'u32[72,128]{1,0:T(1,128)}', space=vmem, size = 0x9000, scoped, tag = 'internal scratch']
  %s0 = inlined_call_operand.vmem [shape: f32[8,32], index: 0, kind: input, shape index: {}]
  %s1 = inlined_call_operand.vmem [shape: f32[16,24], index: 1, kind: input, shape index: {}]
  %s2 = inlined_call_operand.vmem [shape: f32[32,8], index: 2, kind: input, shape index: {}]
  %s3 = inlined_call_operand.vmem [shape: f32[16,32], index: 3, kind: input, shape index: {}]
  %s4 = inlined_call_operand.vmem [shape: f32[32,5], index: 4, kind: input, shape index: {}]
  %s5 = inlined_call_operand.hbm [shape: f32[8,32], index: 5, kind: output, shape index: {}]
  %s6 = sld [smem:[#allocation0]]
  $region30: #{tpu_custom_call.1} parent=0
    _
  %s8 = ssub.s32 1, %s6
  %s9 = scalar_select 0, %s8, %s6
  $region1: #{tpu_custom_call.1} parent=0
    #allocation2 [shape = 'u8[4096]{0}', space=vmem, size = 0x1000, scoped, tag = 'output window, operand 0, single buffered']
    #allocation3 [shape = 's32[1]{0}', space=sflag, size = 0x4, scoped, tag = 'scoped memory for tpu_custom_call.1']
    %10 = vsyncpa [#allocation3], 0
    // Predicated region
    $region2: #{tpu_custom_call.1} parent=1 // pred_check
      _
    $region3: #{tpu_custom_call.1} parent=1 // pred_check_branch
      %12 = sbr.rel (0) target = $region5
    $region4: #{tpu_custom_call.1} parent=1 // pred_region
      _
    $region5: #{tpu_custom_call.1} parent=1 // pred_fallthru
      _
    // Predicated region
    $region6: #{tpu_custom_call.1} parent=1 // pred_check
      _
    $region7: #{tpu_custom_call.1} parent=1 // pred_check_branch
      %14 = sbr.rel (0) target = $region9
    $region8: #{tpu_custom_call.1} parent=1 // pred_region
      _
    $region9: #{tpu_custom_call.1} parent=1 // pred_fallthru
      _
    // Predicated region
    $region10: #{tpu_custom_call.1} parent=1 // pred_check
      _
    $region11: #{tpu_custom_call.1} parent=1 // pred_check_branch
      %16 = sbr.rel (0) target = $region13
    $region12: #{tpu_custom_call.1} parent=1 // pred_region
      _
    $region13: #{tpu_custom_call.1} parent=1 // pred_fallthru
      _
    // Predicated region
    $region14: #{tpu_custom_call.1} parent=1 // pred_check
      _
    $region15: #{tpu_custom_call.1} parent=1 // pred_check_branch
      %18 = sbr.rel (0) target = $region17
    $region16: #{tpu_custom_call.1} parent=1 // pred_region
      _
    $region17: #{tpu_custom_call.1} parent=1 // pred_fallthru
      _
    // Predicated region
    $region18: #{tpu_custom_call.1} parent=1 // pred_check
      _
    $region19: #{tpu_custom_call.1} parent=1 // pred_check_branch
      %20 = sbr.rel (0) target = $region21
    $region20: #{tpu_custom_call.1} parent=1 // pred_region
      _
    $region21: #{tpu_custom_call.1} parent=1 // pred_fallthru
      _
    %v21 = vld [vmem:[%s0] sm:$0xff]
    %v22 = vld [vmem:[%s4] sm:$0xff]
    %v23 = vld [vmem:[%s4 + $0x8] sm:$0xff]
    %v24 = vld [vmem:[%s4 + $0x10] sm:$0xff]
    %v25 = vld [vmem:[%s4 + $0x18] sm:$0xff]
    %v26 = vlaneseq
    %v27 = vand.u32 %v26, 127
    %vm28 = vcmp.ge.s32.totalorder %v27, 16
    %v29 = vsel %vm28, 16, 0
    %v30 = vsub.s32 %v27, %v29
    %vm31 = vcmask 1047808
    %32 = vrot.lane.b32.xlu0 %v21, 32
    %v33 = vpop.permute.xlu0 %32
    %v34 = vsel %vm31, %v33, %v21
    %35 = vrot.lane.b32.xlu0 %v34, 32
    %v36 = vpop.permute.xlu0 %35
    %v37 = vsel %vm31, %v36, %v21
    %v38 = vadd.s32 %v30, 4294967295
    %vm39 = vcmp.ge.s32.totalorder %v38, 0
    %vm40 = vcmp.lt.s32.totalorder %v38, 16
    %vm41 = vmand %vm39, %vm40
    %43 = vrot.lane.b32.xlu0 %v37, 97
    %v44 = vpop.permute.xlu0 %43
    %v46 = vsel %vm41, %v44, 0.0
    %v47 = vadd.s32 %v30, 1
    %vm48 = vcmp.ge.s32.totalorder %v47, 0
    %vm49 = vcmp.lt.s32.totalorder %v47, 16
    %vm50 = vmand %vm48, %vm49
    %51 = vrot.lane.b32.xlu0 %v37, 127
    %v52 = vpop.permute.xlu0 %51
    %v54 = vsel %vm50, %v52, 0.0
    %v55 = vld [vmem:[%s1] sm:$0xff]
    %v56 = vld [vmem:[%s1 + $0x8] sm:$0xff]
    %vm57 = vcmask 195584
    %v59 = vsel %vm57, %v55, 0
    %v62 = vsel %vm57, %v56, 0
    %64 = vmatpush.msra.mxu0 0.0
    %65 = vmatpush.msra.mxu0 0.0
    %66 = vmatpush.msra.mxu0 0.0
    %67 = vmatpush.msra.mxu0 0.0
    %68 = vmatpush.msra.mxu0 0.0
    %69 = vmatpush.msra.mxu0 0.0
    %70 = vmatpush.msra.mxu0 0.0
    %71 = vmatpush.msra.mxu0 0.0
    %72 = vmatpush.msra.mxu0 0.0
    %73 = vmatpush.msra.mxu0 0.0
    %74 = vmatpush.msra.mxu0 0.0
    %75 = vmatpush.msra.mxu0 0.0
    %76 = vmatpush.msra.mxu0 0.0
    %77 = vmatpush.msra.mxu0 %v54
    %78 = vmatpush.msra.mxu0 %v21
    %79 = vmatpush.msra.mxu0 %v46
    %80 = vmatmul.f32.gmra.mxu0 %v59
    %v81 = vpop.f32.mrf.mxu0
    %v82 = vadd.f32 0.0, %v81
    %83 = vmatmul.f32.gmra.mxu0 %v62
    %v84 = vpop.f32.mrf.mxu0
    %v85 = vadd.f32 0.0, %v84
    %86 = vdwg.mxu0
    %88 = vset.pattern.permute.xlu0 0
    %89 = vperm.xlu0 %88, %v22
    %v90 = vpop.permute.xlu0 %89
    %93 = vset.pattern.permute.xlu0 0
    %94 = vperm.xlu0 %93, %v23
    %v95 = vpop.permute.xlu0 %94
    %v97 = vmul.f32 %v82, %v90
    %v98 = vmul.f32 %v85, %v95
    %99 = vset.pattern.permute.xlu0 1
    %100 = vperm.xlu0 %99, %v22
    %v101 = vpop.permute.xlu0 %100
    %103 = vset.pattern.permute.xlu0 1
    %104 = vperm.xlu0 %103, %v23
    %v105 = vpop.permute.xlu0 %104
    %v107 = vadd.f32 %v97, %v101
    %v108 = vadd.f32 %v98, %v105
    %v109 = vmax.f32 %v107, 0.0
    %v110 = vmax.f32 %v108, 0.0
    %v111 = vadd.f32 %v109, %v110
    %v112 = vlaneseq
    %v113 = vshrl.u32 %v112, 7
    %v114 = vadd.s32 %v113, 8
    %v115 = vadd.s32 %v113, 16
    %v116 = vadd.s32 %v113, 24
    %vm117 = vcmp.ge.s32.totalorder %v113, 16
    %vm118 = vcmp.ge.s32.totalorder %v114, 16
    %vm119 = vcmp.ge.s32.totalorder %v115, 16
    %vm120 = vcmp.ge.s32.totalorder %v116, 16
    %v121 = vsel %vm117, 1, 0
    %v122 = vsel %vm118, 1, 0
    %v123 = vsel %vm119, 1, 0
    %v124 = vsel %vm120, 1, 0
    %v125 = vsel %vm28, 1, 0
    %vm126 = vcmp.eq.s32.totalorder %v121, %v125
    %vm127 = vcmp.eq.s32.totalorder %v122, %v125
    %vm128 = vcmp.eq.s32.totalorder %v123, %v125
    %vm129 = vcmp.eq.s32.totalorder %v124, %v125
    %v130 = vsel %vm126, 0.0625, 0.0
    %v131 = vsel %vm127, 0.0625, 0.0
    %v132 = vsel %vm128, 0.0625, 0.0
    %v133 = vsel %vm129, 0.0625, 0.0
    %vm134 = vcmask 261120
    %v136 = vsel %vm134, %v111, 0
    %138 = vmatpush.msra.mxu0 0.0
    %139 = vmatpush.msra.mxu0 0.0
    %140 = vmatpush.msra.mxu0 0.0
    %141 = vmatpush.msra.mxu0 0.0
    %142 = vmatpush.msra.mxu0 0.0
    %143 = vmatpush.msra.mxu0 0.0
    %144 = vmatpush.msra.mxu0 0.0
    %145 = vmatpush.msra.mxu0 0.0
    %146 = vmatpush.msra.mxu0 0.0
    %147 = vmatpush.msra.mxu0 0.0
    %148 = vmatpush.msra.mxu0 0.0
    %149 = vmatpush.msra.mxu0 0.0
    %150 = vmatpush.msra.mxu0 %v133
    %151 = vmatpush.msra.mxu0 %v132
    %152 = vmatpush.msra.mxu0 %v131
    %153 = vmatpush.msra.mxu0 %v130
    %154 = vmatmul.f32.gmra.mxu0 %v136
    %v155 = vpop.f32.mrf.mxu0
    %v156 = vadd.f32 0.0, %v155
    %157 = vdwg.mxu0
    %v158 = vld [vmem:[%s2] sm:$0xff]
    %v159 = vld [vmem:[%s2 + $0x8] sm:$0xff]
    %v160 = vld [vmem:[%s2 + $0x10] sm:$0xff]
    %v161 = vld [vmem:[%s2 + $0x18] sm:$0xff]
    %vm162 = vcmask 64512
    %v164 = vsel %vm162, %v158, 0
    %v167 = vsel %vm162, %v159, 0
    %v170 = vsel %vm162, %v160, 0
    %v173 = vsel %vm162, %v161, 0
    %175 = vmatpush.msra.mxu0 0.0
    %176 = vmatpush.msra.mxu0 0.0
    %177 = vmatpush.msra.mxu0 0.0
    %178 = vmatpush.msra.mxu0 0.0
    %179 = vmatpush.msra.mxu0 0.0
    %180 = vmatpush.msra.mxu0 0.0
    %181 = vmatpush.msra.mxu0 0.0
    %182 = vmatpush.msra.mxu0 0.0
    %183 = vmatpush.msra.mxu0 0.0
    %184 = vmatpush.msra.mxu0 0.0
    %185 = vmatpush.msra.mxu0 0.0
    %186 = vmatpush.msra.mxu0 0.0
    %187 = vmatpush.msra.mxu0 0.0
    %188 = vmatpush.msra.mxu0 0.0
    %189 = vmatpush.msra.mxu0 0.0
    %190 = vmatpush.msra.mxu0 %v156
    %191 = vmatmul.f32.gmra.mxu0 %v164
    %v192 = vpop.f32.mrf.mxu0
    %v193 = vadd.f32 0.0, %v192
    %194 = vmatmul.f32.gmra.mxu0 %v167
    %v195 = vpop.f32.mrf.mxu0
    %v196 = vadd.f32 0.0, %v195
    %197 = vmatmul.f32.gmra.mxu0 %v170
    %v198 = vpop.f32.mrf.mxu0
    %v199 = vadd.f32 0.0, %v198
    %200 = vmatmul.f32.gmra.mxu0 %v173
    %v201 = vpop.f32.mrf.mxu0
    %v202 = vadd.f32 0.0, %v201
    %203 = vdwg.mxu0
    %204 = vset.pattern.permute.xlu0 2
    %205 = vperm.xlu0 %204, %v22
    %v206 = vpop.permute.xlu0 %205
    %208 = vset.pattern.permute.xlu0 2
    %209 = vperm.xlu0 %208, %v23
    %v210 = vpop.permute.xlu0 %209
    %213 = vset.pattern.permute.xlu0 2
    %214 = vperm.xlu0 %213, %v24
    %v215 = vpop.permute.xlu0 %214
    %218 = vset.pattern.permute.xlu0 2
    %219 = vperm.xlu0 %218, %v25
    %v220 = vpop.permute.xlu0 %219
    %v222 = vmul.f32 %v193, %v206
    %v223 = vmul.f32 %v196, %v210
    %v224 = vmul.f32 %v199, %v215
    %v225 = vmul.f32 %v202, %v220
    %226 = vset.pattern.permute.xlu0 3
    %227 = vperm.xlu0 %226, %v22
    %v228 = vpop.permute.xlu0 %227
    %230 = vset.pattern.permute.xlu0 3
    %231 = vperm.xlu0 %230, %v23
    %v232 = vpop.permute.xlu0 %231
    %234 = vset.pattern.permute.xlu0 3
    %235 = vperm.xlu0 %234, %v24
    %v236 = vpop.permute.xlu0 %235
    %238 = vset.pattern.permute.xlu0 3
    %239 = vperm.xlu0 %238, %v25
    %v240 = vpop.permute.xlu0 %239
    %v242 = vadd.f32 %v222, %v228
    %v243 = vadd.f32 %v223, %v232
    %v244 = vadd.f32 %v224, %v236
    %v245 = vadd.f32 %v225, %v240
    %v246 = vmax.f32 %v242, 0.0
    %v247 = vmax.f32 %v243, 0.0
    %v248 = vmax.f32 %v244, 0.0
    %v249 = vmax.f32 %v245, 0.0
    %v250 = vld [vmem:[%s3] sm:$0xff]
    %v251 = vld [vmem:[%s3 + $0x8] sm:$0xff]
    %252 = vset.pattern.permute.xlu0 4
    %253 = vperm.xlu0 %252, %v22
    %v254 = vpop.permute.xlu0 %253
    %256 = vset.pattern.permute.xlu0 4
    %257 = vperm.xlu0 %256, %v23
    %v258 = vpop.permute.xlu0 %257
    %v261 = vsel %vm134, %v250, 0
    %v264 = vsel %vm134, %v251, 0
    %266 = vmatpush.msra.mxu0 0.0
    %267 = vmatpush.msra.mxu0 0.0
    %268 = vmatpush.msra.mxu0 0.0
    %269 = vmatpush.msra.mxu0 0.0
    %270 = vmatpush.msra.mxu0 0.0
    %271 = vmatpush.msra.mxu0 0.0
    %272 = vmatpush.msra.mxu0 0.0
    %273 = vmatpush.msra.mxu0 0.0
    %274 = vmatpush.msra.mxu0 0.0
    %275 = vmatpush.msra.mxu0 0.0
    %276 = vmatpush.msra.mxu0 0.0
    %277 = vmatpush.msra.mxu0 0.0
    %278 = vmatpush.msra.mxu0 %v249
    %279 = vmatpush.msra.mxu0 %v248
    %280 = vmatpush.msra.mxu0 %v247
    %281 = vmatpush.msra.mxu0 %v246
    %282 = vmatmul.f32.gmra.mxu0 %v261
    %v283 = vpop.f32.mrf.mxu0
    %v284 = vadd.f32 %v254, %v283
    %285 = vmatmul.f32.gmra.mxu0 %v264
    %v286 = vpop.f32.mrf.mxu0
    %v287 = vadd.f32 %v258, %v286
    %288 = vdwg.mxu0
    %v289 = vmax.f32 %v284, %v287
    %v290 = vsub.f32 %v284, %v289
    %v291 = vmul.f32 %v290, 1.442695
    %v292 = vpow.pop %v291
    %v293 = vsub.f32 %v287, %v289
    %v294 = vmul.f32 %v293, 1.442695
    %v295 = vpow.pop %v294
    %v296 = vadd.f32 %v292, %v295
    %v297 = vrcp.pop %v296
    %v298 = vmul.f32 %v292, %v297
    %v299 = vmul.f32 %v295, %v297
    %v300 = vmul.f32 %v298, %v109
    %v301 = vmul.f32 %v299, %v110
    %v302 = vadd.f32 %v300, %v301
    %303 = vst.msk [vmem:[#allocation2] sm:$0xff] %vm134, %v302
    // Predicated region
    $region22: #{tpu_custom_call.1} parent=1 // pred_check
      _
    $region23: #{tpu_custom_call.1} parent=1 // pred_check_branch
      %305 = sbr.rel (0) target = $region25
    $region24: #{tpu_custom_call.1} parent=1 // pred_region
      %307 = vsyncadd [#allocation3], 0
      %s309 = sshll.u32 [#allocation2], 4
      %s310 = int_to_ptr.vmem [resolvable:$true] %s309
      %s311 = sshll.u32 %s5, 4
      %s312 = int_to_ptr.hbm [resolvable:$true] %s311
      %314 = dma.vmem_to_hbm [thread:$0]  %s310, 128, %s312, [#allocation3]
    $region25: #{tpu_custom_call.1} parent=1 // pred_fallthru
      _
    // Predicated region
    $region26: #{tpu_custom_call.1} parent=1 // pred_check
      _
    $region27: #{tpu_custom_call.1} parent=1 // pred_check_branch
      %316 = sbr.rel (0) target = $region29
    $region28: #{tpu_custom_call.1} parent=1 // pred_region
      %318 = dma.done [#allocation3], 128
    $region29: #{tpu_custom_call.1} parent=1 // pred_fallthru
      _
    %319 = vsyncpa [#allocation3], 1

</llo_original>
